<compile_context>
chip_gen: v6e
topology: v6e:2x2x1
jax: 0.10.0
libtpu: 0.0.40
codegen_flags: <defaults>
</compile_context>

<pallas_src>
import functools

import jax
import jax.numpy as jnp
from jax.experimental import pallas as pl
from jax.experimental.pallas import tpu as pltpu

_EPS = 1e-5


# --------------------------------------------------------------------------
# Kernels
# --------------------------------------------------------------------------
def _cbn_resident_kernel(x_ref, p_ref, y_ref):
    """Single-pass kernel: stats + normalize for one channel tile.

    x_ref / y_ref: (B, 2, TF, HW);  p_ref: (TF, 8) = [Wrr,Wri,Wii,Br,Bi,pad].
    """
    xr = x_ref[:, 0, :, :].astype(jnp.float32)        # (B, TF, HW)
    xi = x_ref[:, 1, :, :].astype(jnp.float32)

    n = xr.shape[0] * xr.shape[2]
    inv_n = jnp.float32(1.0 / n)

    def csum(v):
        # (B, TF, HW) -> (TF, 1): accumulate over batch with VALU vreg adds
        # first, then one lane reduction per channel row (keeps XLU work
        # O(TF) instead of O(#vregs)).
        return jnp.sum(jnp.sum(v, axis=0), axis=-1, keepdims=True)

    Mr = csum(xr) * inv_n                             # (TF, 1)
    Mi = csum(xi) * inv_n

    # Two-pass covariance; centering is recomputed inline inside each sum so
    # no centered full-tile copy needs to stay live past the stats phase.
    Vrr = csum((xr - Mr) * (xr - Mr)) * inv_n + _EPS
    Vri = csum((xr - Mr) * (xi - Mi)) * inv_n
    Vii = csum((xi - Mi) * (xi - Mi)) * inv_n + _EPS

    # Inverse matrix square root of the per-channel 2x2 covariance.
    tau = Vrr + Vii
    delta = Vrr * Vii - Vri * Vri
    s = jnp.sqrt(delta)
    t = jnp.sqrt(tau + 2.0 * s)
    rst = 1.0 / (s * t)                               # per-channel scalars
    Urr = (s + Vii) * rst
    Uii = (s + Vrr) * rst
    Uri = -Vri * rst

    p = p_ref[...]                                    # (TF, 8)
    Wrr, Wri, Wii = p[:, 0:1], p[:, 1:2], p[:, 2:3]   # (TF, 1)
    Br, Bi = p[:, 3:4], p[:, 4:5]

    Zrr = Wrr * Urr + Wri * Uri
    Zri = Wrr * Uri + Wri * Uii
    Zir = Wri * Urr + Wii * Uri
    Zii = Wri * Uri + Wii * Uii

    # Fold the mean subtraction into the bias: y = Z @ x + (B - Z @ M).
    br_eff = Br - (Zrr * Mr + Zri * Mi)
    bi_eff = Bi - (Zir * Mr + Zii * Mi)

    y_ref[:, 0, :, :] = (Zrr * xr + Zri * xi + br_eff).astype(y_ref.dtype)
    y_ref[:, 1, :, :] = (Zir * xr + Zii * xi + bi_eff).astype(y_ref.dtype)


def _cbn_stats_kernel(x_ref, s_ref, acc_ref, *, thw, hw_total, mask_tail):
    """Streamed path, pass 1: accumulate per-channel raw moments.

    x_ref: (B, 2, TF, THW);  s_ref/acc_ref: (TF, 8) = [Sr,Si,Srr,Sri,Sii,pad].
    Grid: (channel tiles, HW chunks); the HW-chunk axis is the reduction.
    """
    j = pl.program_id(1)

    @pl.when(j == 0)
    def _init():
        acc_ref[...] = jnp.zeros_like(acc_ref)

    xr = x_ref[:, 0, :, :].astype(jnp.float32)        # (B, TF, THW)
    xi = x_ref[:, 1, :, :].astype(jnp.float32)

    if mask_tail:
        # The last HW chunk may extend past the array; zero the overhang so
        # it does not pollute the sums.
        col = jax.lax.broadcasted_iota(jnp.int32, xr.shape, 2) + j * thw
        valid = col < hw_total
        xr = jnp.where(valid, xr, 0.0)
        xi = jnp.where(valid, xi, 0.0)

    def csum(v):                                      # (B, TF, THW) -> (TF, 1)
        return jnp.sum(jnp.sum(v, axis=0), axis=-1, keepdims=True)

    acc_ref[:, 0:1] += csum(xr)
    acc_ref[:, 1:2] += csum(xi)
    acc_ref[:, 2:3] += csum(xr * xr)
    acc_ref[:, 3:4] += csum(xr * xi)
    acc_ref[:, 4:5] += csum(xi * xi)

    @pl.when(j == pl.num_programs(1) - 1)
    def _flush():
        s_ref[...] = acc_ref[...]


def _cbn_apply_kernel(x_ref, z_ref, y_ref):
    """Streamed path, pass 2: y = Z @ x + b_eff (mean folded into bias).

    x_ref / y_ref: (B, 2, TF, THW);  z_ref: (TF, 8) = [Zrr,Zri,Zir,Zii,br,bi].
    """
    xr = x_ref[:, 0, :, :].astype(jnp.float32)
    xi = x_ref[:, 1, :, :].astype(jnp.float32)
    z = z_ref[...]
    Zrr, Zri, Zir, Zii = z[:, 0:1], z[:, 1:2], z[:, 2:3], z[:, 3:4]
    br_eff, bi_eff = z[:, 4:5], z[:, 5:6]
    y_ref[:, 0, :, :] = (Zrr * xr + Zri * xi + br_eff).astype(y_ref.dtype)
    y_ref[:, 1, :, :] = (Zir * xr + Zii * xi + bi_eff).astype(y_ref.dtype)


# --------------------------------------------------------------------------
# Tiling / VMEM accounting
# --------------------------------------------------------------------------
def _round_up(x, m):
    return ((x + m - 1) // m) * m


def _vmem_budgets():
    """(block_budget_bytes, vmem_limit_bytes), chosen per TPU generation."""
    block_budget, vmem_limit = 14 << 20, 40 << 20       # safe for v7x (64 MiB)
    try:
        cap = int(pltpu.get_tpu_info().vmem_capacity_bytes)
        if cap > (64 << 20):                            # v5e / v6e: 128 MiB
            block_budget, vmem_limit = 36 << 20, 64 << 20
    except Exception:
        pass                                            # conservative defaults
    return block_budget, vmem_limit


def _resident_bytes_per_channel(B, HW, dtype_bytes):
    """VMEM bytes per channel for the resident path: double-buffered in+out
    pipeline blocks + in-kernel f32 working set (xr/xi upcasts, one product in
    flight, partial-reduction intermediates)."""
    pipeline = 4 * B * 2 * HW * dtype_bytes
    working = 4 * B * HW * 4 + 2 * HW * 4
    return pipeline + working


def _choose_tf(F, B, HW, dtype_bytes, block_budget_bytes):
    """Channel-tile size for the resident path, or None if it cannot fit."""
    per_chan = _resident_bytes_per_channel(B, HW, dtype_bytes)
    candidates = [d for d in range(1, F + 1)
                  if F % d == 0 and (d % 8 == 0 or d == F)]
    fitting = [d for d in candidates if d * per_chan <= block_budget_bytes]
    if not fitting:
        return None
    tf = max(fitting)
    # Guarantee >= 2 grid steps whenever F allows (v7x 2-TC sharding and
    # pipeline overlap); go to >= 4 steps only while blocks stay >= 1 MiB.
    two = [d for d in fitting if F // d >= 2]
    if two:
        tf = max(two)
        four = [d for d in two if F // d >= 4 and d * per_chan >= (1 << 20)]
        if four:
            tf = max(four)
    return tf


def _choose_streamed_tiles(F, B, HW, dtype_bytes, block_budget_bytes):
    """(TF, THW) for the two-phase streamed path."""
    tf = 8 if F % 8 == 0 else F
    # TODO(synk): if F is huge and not a multiple of 8 this can still exceed
    #             VMEM; a padded channel axis would be needed for that corner.
    per_hw = 4 * B * 2 * tf * dtype_bytes + 3 * B * tf * 4
    max_thw = max(block_budget_bytes // per_hw, 128)
    thw = max((max_thw // 128) * 128, 128)
    return tf, min(thw, _round_up(HW, 128))


# --------------------------------------------------------------------------
# Wrappers
# --------------------------------------------------------------------------
def _resident_forward(x4, wrr, wri, wii, br, bi, tf, vmem_limit):
    B, _, F, HW = x4.shape
    itemsize = jnp.dtype(x4.dtype).itemsize

    # Pack the five per-channel parameters into one lane-padded array
    # (one parameter DMA per grid step instead of five).
    params = jnp.stack([wrr, wri, wii, br, bi], axis=1).astype(jnp.float32)
    params = jnp.pad(params, ((0, 0), (0, 3)))                 # (F, 8)

    cost = pl.CostEstimate(flops=18 * B * F * HW,
                           transcendentals=3 * F,
                           bytes_accessed=2 * B * 2 * F * HW * itemsize)
    return pl.pallas_call(
        _cbn_resident_kernel,
        out_shape=jax.ShapeDtypeStruct((B, 2, F, HW), x4.dtype),
        grid=(F // tf,),
        in_specs=[
            pl.BlockSpec((B, 2, tf, HW), lambda i: (0, 0, i, 0)),
            pl.BlockSpec((tf, 8), lambda i: (i, 0)),
        ],
        out_specs=pl.BlockSpec((B, 2, tf, HW), lambda i: (0, 0, i, 0)),
        compiler_params=pltpu.CompilerParams(
            dimension_semantics=("parallel",),
            vmem_limit_bytes=vmem_limit),
        cost_estimate=cost,
    )(x4, params)


def _streamed_forward(x4, wrr, wri, wii, br, bi, block_budget, vmem_limit):
    B, _, F, HW = x4.shape
    itemsize = jnp.dtype(x4.dtype).itemsize
    tf, thw = _choose_streamed_tiles(F, B, HW, itemsize, block_budget)
    nc = pl.cdiv(HW, thw)
    grid = (F // tf, nc)

    # -- pass 1: per-channel raw moments, accumulated over HW chunks --------
    stats_cost = pl.CostEstimate(flops=10 * B * F * HW, transcendentals=0,
                                 bytes_accessed=B * 2 * F * HW * itemsize)
    sums = pl.pallas_call(
        functools.partial(_cbn_stats_kernel, thw=thw, hw_total=HW,
                          mask_tail=(HW % thw != 0)),
        out_shape=jax.ShapeDtypeStruct((F, 8), jnp.float32),
        grid=grid,
        in_specs=[pl.BlockSpec((B, 2, tf, thw), lambda i, j: (0, 0, i, j))],
        out_specs=pl.BlockSpec((tf, 8), lambda i, j: (i, 0)),
        scratch_shapes=[pltpu.VMEM((tf, 8), jnp.float32)],
        compiler_params=pltpu.CompilerParams(
            dimension_semantics=("parallel", "arbitrary"),
            vmem_limit_bytes=vmem_limit),
        cost_estimate=stats_cost,
    )(x4)

    # -- per-channel 2x2 whitening + affine fold (tiny (F,) math, plain JAX) -
    n = float(B * HW)
    Mr, Mi = sums[:, 0] / n, sums[:, 1] / n
    # TODO(synk): one-pass moments (E[x^2] - M^2) can lose precision when
    #             |mean| >> std; the resident path keeps two-pass numerics.
    Vrr = sums[:, 2] / n - Mr * Mr + _EPS
    Vri = sums[:, 3] / n - Mr * Mi
    Vii = sums[:, 4] / n - Mi * Mi + _EPS
    tau = Vrr + Vii
    delta = Vrr * Vii - Vri * Vri
    s = jnp.sqrt(delta)
    t = jnp.sqrt(tau + 2.0 * s)
    rst = 1.0 / (s * t)
    Urr = (s + Vii) * rst
    Uii = (s + Vrr) * rst
    Uri = -Vri * rst
    Wrr = wrr.astype(jnp.float32)
    Wri = wri.astype(jnp.float32)
    Wii = wii.astype(jnp.float32)
    Zrr = Wrr * Urr + Wri * Uri
    Zri = Wrr * Uri + Wri * Uii
    Zir = Wri * Urr + Wii * Uri
    Zii = Wri * Uri + Wii * Uii
    br_eff = br.astype(jnp.float32) - (Zrr * Mr + Zri * Mi)
    bi_eff = bi.astype(jnp.float32) - (Zir * Mr + Zii * Mi)
    zpack = jnp.pad(jnp.stack([Zrr, Zri, Zir, Zii, br_eff, bi_eff], axis=1),
                    ((0, 0), (0, 2)))                          # (F, 8)

    # -- pass 2: elementwise apply, streamed over the same chunks ------------
    apply_cost = pl.CostEstimate(flops=8 * B * F * HW, transcendentals=0,
                                 bytes_accessed=2 * B * 2 * F * HW * itemsize)
    return pl.pallas_call(
        _cbn_apply_kernel,
        out_shape=jax.ShapeDtypeStruct((B, 2, F, HW), x4.dtype),
        grid=grid,
        in_specs=[pl.BlockSpec((B, 2, tf, thw), lambda i, j: (0, 0, i, j)),
                  pl.BlockSpec((tf, 8), lambda i, j: (i, 0))],
        out_specs=pl.BlockSpec((B, 2, tf, thw), lambda i, j: (0, 0, i, j)),
        compiler_params=pltpu.CompilerParams(
            dimension_semantics=("parallel", "parallel"),
            vmem_limit_bytes=vmem_limit),
        cost_estimate=apply_cost,
    )(x4, zpack)


@functools.partial(jax.jit, static_argnames=("block_budget_bytes",))
def complex_batch_norm(x, wrr, wri, wii, br, bi, block_budget_bytes=None):
    """Forward of ComplexBatchNorm (training-mode batch stats, affine=True).

    x: (B, 2*F, H, W); each parameter: (F,). Returns (B, 2*F, H, W)."""
    B, C2, H, W = x.shape
    F = C2 // 2
    HW = H * W
    dtype_bytes = jnp.dtype(x.dtype).itemsize

    block_budget, vmem_limit = _vmem_budgets()
    if block_budget_bytes is not None:
        block_budget = block_budget_bytes

    # Free reshape: channel axis 2F -> (2, F); part 0 = real, part 1 = imag,
    # exactly matching torch.chunk(inputs, 2, axis=1).
    x4 = x.reshape(B, 2, F, HW)

    tf = _choose_tf(F, B, HW, dtype_bytes, block_budget)
    if tf is not None:
        y4 = _resident_forward(x4, wrr, wri, wii, br, bi, tf, vmem_limit)
    else:
        y4 = _streamed_forward(x4, wrr, wri, wii, br, bi,
                               block_budget, vmem_limit)
    return y4.reshape(B, C2, H, W)


# --------------------------------------------------------------------------
# Pure-JAX reference + test
# --------------------------------------------------------------------------
def _reference(x, wrr, wri, wii, br, bi):
    """Pure-JAX replica of ComplexBatchNorm.forward (training, affine=True)."""
    B, C2, H, W = x.shape
    F = C2 // 2
    xr, xi = x[:, :F], x[:, F:]
    vdim = (1, F, 1, 1)
    Mr = jnp.mean(xr, axis=(0, 2, 3), keepdims=True)
    Mi = jnp.mean(xi, axis=(0, 2, 3), keepdims=True)
    xr, xi = xr - Mr, xi - Mi
    Vrr = jnp.mean(xr * xr, axis=(0, 2, 3), keepdims=True) + _EPS
    Vri = jnp.mean(xr * xi, axis=(0, 2, 3), keepdims=True)
    Vii = jnp.mean(xi * xi, axis=(0, 2, 3), keepdims=True) + _EPS
    tau = Vrr + Vii
    delta = Vrr * Vii - Vri * Vri
    s = jnp.sqrt(delta)
    t = jnp.sqrt(tau + 2 * s)
    rst = 1.0 / (s * t)
    Urr = (s + Vii) * rst
    Uii = (s + Vrr) * rst
    Uri = -Vri * rst
    Wrr, Wri, Wii = wrr.reshape(vdim), wri.reshape(vdim), wii.reshape(vdim)
    Zrr = Wrr * Urr + Wri * Uri
    Zri = Wrr * Uri + Wri * Uii
    Zir = Wri * Urr + Wii * Uri
    Zii = Wri * Uri + Wii * Uii
    yr = Zrr * xr + Zri * xi + br.reshape(vdim)
    yi = Zir * xr + Zii * xi + bi.reshape(vdim)
    return jnp.concatenate([yr, yi], axis=1)


if __name__ == "__main__":
    key = jax.random.PRNGKey(0)
    k_x1, k_w1, k_b1, k_x2, k_w2, k_b2 = jax.random.split(key, 6)

    def make_params(F, kw, kb):
        # Wrr/Wii = 1, Wri ~ U(-0.9, 0.9) mirrors reset_parameters(); small
        # nonzero biases are used only to exercise the bias-fold path.
        wrr = jnp.ones((F,), jnp.float32)
        wii = jnp.ones((F,), jnp.float32)
        wri = jax.random.uniform(kw, (F,), jnp.float32, minval=-0.9, maxval=0.9)
        b = 0.1 * jax.random.normal(kb, (2, F), jnp.float32)
        return wrr, wri, wii, b[0], b[1]

    # --- 1. resident single-pass path (2-step channel grid) ----------------
    B, C2, H, W = 2, 32, 16, 16              # num_features=32 -> F=16
    F = C2 // 2
    x = 1.5 * jax.random.normal(k_x1, (B, C2, H, W), jnp.float32) + 0.3
    wrr, wri, wii, br, bi = make_params(F, k_w1, k_b1)
    out = jax.block_until_ready(complex_batch_norm(x, wrr, wri, wii, br, bi))
    ref = _reference(x, wrr, wri, wii, br, bi)
    assert out.shape == x.shape
    assert jnp.max(jnp.abs(out - ref)) < 1e-4, "resident path mismatch"

    # --- 2. streamed two-phase fallback (forced with a tiny block budget) ---
    B2, C22, H2, W2 = 2, 16, 16, 32          # F=8, HW=512 -> 4 chunks of 128
    F2 = C22 // 2
    x2 = 1.5 * jax.random.normal(k_x2, (B2, C22, H2, W2), jnp.float32) + 0.3
    wrr2, wri2, wii2, br2, bi2 = make_params(F2, k_w2, k_b2)
    out2 = jax.block_until_ready(
        complex_batch_norm(x2, wrr2, wri2, wii2, br2, bi2,
                           block_budget_bytes=64 * 1024))
    ref2 = _reference(x2, wrr2, wri2, wii2, br2, bi2)
    assert out2.shape == x2.shape
    assert jnp.max(jnp.abs(out2 - ref2)) < 1e-4, "streamed path mismatch"

    print("KERNEL_OK")
</pallas_src>

<mosaic_0001>
module attributes {stable_mosaic.version = 11 : i64} {
  func.func @_cbn_resident_kernel(%arg0: i32, %arg1: memref<2x2x8x256xf32, #tpu.memory_space<vmem>>, %arg2: memref<8x8xf32, #tpu.memory_space<vmem>>, %arg3: memref<2x2x8x256xf32, #tpu.memory_space<vmem>>) attributes {dimension_semantics = [#tpu.dimension_semantics<parallel>], iteration_bounds = array<i64: 2>, scalar_prefetch = 0 : i64, scratch_operands = 0 : i64, tpu.core_type = #tpu.core_type<tc>, window_params = [{transform_indices = @transform_0, window_bounds = array<i64: 2, 2, 8, 256>}, {transform_indices = @transform_1, window_bounds = array<i64: 8, 8>}, {transform_indices = @transform_2, window_bounds = array<i64: 2, 2, 8, 256>}]} {
    %c0 = arith.constant 0 : index
    %c0_0 = arith.constant 0 : index
    %c0_1 = arith.constant 0 : index
    %c0_2 = arith.constant 0 : index
    %0 = vector.load %arg1[%c0, %c0_0, %c0_1, %c0_2] : memref<2x2x8x256xf32, #tpu.memory_space<vmem>>, vector<2x1x8x256xf32>
    %1 = vector.shape_cast %0 : vector<2x1x8x256xf32> to vector<2x8x256xf32>
    %c0_3 = arith.constant 0 : index
    %c1 = arith.constant 1 : index
    %c0_4 = arith.constant 0 : index
    %c0_5 = arith.constant 0 : index
    %2 = vector.load %arg1[%c0_3, %c1, %c0_4, %c0_5] : memref<2x2x8x256xf32, #tpu.memory_space<vmem>>, vector<2x1x8x256xf32>
    %3 = vector.shape_cast %2 : vector<2x1x8x256xf32> to vector<2x8x256xf32>
    %cst = arith.constant dense<0.000000e+00> : vector<8x256xf32>
    %4 = vector.multi_reduction <add>, %1, %cst [0] : vector<2x8x256xf32> to vector<8x256xf32>
    %cst_6 = arith.constant dense<0.000000e+00> : vector<8xf32>
    %5 = vector.multi_reduction <add>, %4, %cst_6 [1] : vector<8x256xf32> to vector<8xf32>
    %6 = vector.shape_cast %5 : vector<8xf32> to vector<8x1xf32>
    %cst_7 = arith.constant 0.001953125 : f32
    %7 = vector.broadcast %cst_7 : f32 to vector<8x1xf32>
    %8 = arith.mulf %6, %7 : vector<8x1xf32>
    %cst_8 = arith.constant dense<0.000000e+00> : vector<8x256xf32>
    %9 = vector.multi_reduction <add>, %3, %cst_8 [0] : vector<2x8x256xf32> to vector<8x256xf32>
    %cst_9 = arith.constant dense<0.000000e+00> : vector<8xf32>
    %10 = vector.multi_reduction <add>, %9, %cst_9 [1] : vector<8x256xf32> to vector<8xf32>
    %11 = vector.shape_cast %10 : vector<8xf32> to vector<8x1xf32>
    %cst_10 = arith.constant 0.001953125 : f32
    %12 = vector.broadcast %cst_10 : f32 to vector<8x1xf32>
    %13 = arith.mulf %11, %12 : vector<8x1xf32>
    %14 = vector.shape_cast %8 : vector<8x1xf32> to vector<1x8x1xf32>
    %15 = vector.broadcast %14 : vector<1x8x1xf32> to vector<2x8x256xf32>
    %16 = arith.subf %1, %15 : vector<2x8x256xf32>
    %17 = vector.shape_cast %8 : vector<8x1xf32> to vector<1x8x1xf32>
    %18 = vector.broadcast %17 : vector<1x8x1xf32> to vector<2x8x256xf32>
    %19 = arith.subf %1, %18 : vector<2x8x256xf32>
    %20 = arith.mulf %16, %19 : vector<2x8x256xf32>
    %cst_11 = arith.constant dense<0.000000e+00> : vector<8x256xf32>
    %21 = vector.multi_reduction <add>, %20, %cst_11 [0] : vector<2x8x256xf32> to vector<8x256xf32>
    %cst_12 = arith.constant dense<0.000000e+00> : vector<8xf32>
    %22 = vector.multi_reduction <add>, %21, %cst_12 [1] : vector<8x256xf32> to vector<8xf32>
    %23 = vector.shape_cast %22 : vector<8xf32> to vector<8x1xf32>
    %cst_13 = arith.constant 0.001953125 : f32
    %24 = vector.broadcast %cst_13 : f32 to vector<8x1xf32>
    %25 = arith.mulf %23, %24 : vector<8x1xf32>
    %cst_14 = arith.constant 9.99999974E-6 : f32
    %26 = vector.broadcast %cst_14 : f32 to vector<8x1xf32>
    %27 = arith.addf %25, %26 : vector<8x1xf32>
    %28 = vector.shape_cast %8 : vector<8x1xf32> to vector<1x8x1xf32>
    %29 = vector.broadcast %28 : vector<1x8x1xf32> to vector<2x8x256xf32>
    %30 = arith.subf %1, %29 : vector<2x8x256xf32>
    %31 = vector.shape_cast %13 : vector<8x1xf32> to vector<1x8x1xf32>
    %32 = vector.broadcast %31 : vector<1x8x1xf32> to vector<2x8x256xf32>
    %33 = arith.subf %3, %32 : vector<2x8x256xf32>
    %34 = arith.mulf %30, %33 : vector<2x8x256xf32>
    %cst_15 = arith.constant dense<0.000000e+00> : vector<8x256xf32>
    %35 = vector.multi_reduction <add>, %34, %cst_15 [0] : vector<2x8x256xf32> to vector<8x256xf32>
    %cst_16 = arith.constant dense<0.000000e+00> : vector<8xf32>
    %36 = vector.multi_reduction <add>, %35, %cst_16 [1] : vector<8x256xf32> to vector<8xf32>
    %37 = vector.shape_cast %36 : vector<8xf32> to vector<8x1xf32>
    %cst_17 = arith.constant 0.001953125 : f32
    %38 = vector.broadcast %cst_17 : f32 to vector<8x1xf32>
    %39 = arith.mulf %37, %38 : vector<8x1xf32>
    %40 = vector.shape_cast %13 : vector<8x1xf32> to vector<1x8x1xf32>
    %41 = vector.broadcast %40 : vector<1x8x1xf32> to vector<2x8x256xf32>
    %42 = arith.subf %3, %41 : vector<2x8x256xf32>
    %43 = vector.shape_cast %13 : vector<8x1xf32> to vector<1x8x1xf32>
    %44 = vector.broadcast %43 : vector<1x8x1xf32> to vector<2x8x256xf32>
    %45 = arith.subf %3, %44 : vector<2x8x256xf32>
    %46 = arith.mulf %42, %45 : vector<2x8x256xf32>
    %cst_18 = arith.constant dense<0.000000e+00> : vector<8x256xf32>
    %47 = vector.multi_reduction <add>, %46, %cst_18 [0] : vector<2x8x256xf32> to vector<8x256xf32>
    %cst_19 = arith.constant dense<0.000000e+00> : vector<8xf32>
    %48 = vector.multi_reduction <add>, %47, %cst_19 [1] : vector<8x256xf32> to vector<8xf32>
    %49 = vector.shape_cast %48 : vector<8xf32> to vector<8x1xf32>
    %cst_20 = arith.constant 0.001953125 : f32
    %50 = vector.broadcast %cst_20 : f32 to vector<8x1xf32>
    %51 = arith.mulf %49, %50 : vector<8x1xf32>
    %cst_21 = arith.constant 9.99999974E-6 : f32
    %52 = vector.broadcast %cst_21 : f32 to vector<8x1xf32>
    %53 = arith.addf %51, %52 : vector<8x1xf32>
    %54 = arith.addf %27, %53 : vector<8x1xf32>
    %55 = arith.mulf %27, %53 : vector<8x1xf32>
    %56 = arith.mulf %39, %39 : vector<8x1xf32>
    %57 = arith.subf %55, %56 : vector<8x1xf32>
    %58 = math.sqrt %57 : vector<8x1xf32>
    %cst_22 = arith.constant 2.000000e+00 : f32
    %59 = vector.broadcast %cst_22 : f32 to vector<8x1xf32>
    %60 = arith.mulf %59, %58 : vector<8x1xf32>
    %61 = arith.addf %54, %60 : vector<8x1xf32>
    %62 = math.sqrt %61 : vector<8x1xf32>
    %63 = arith.mulf %58, %62 : vector<8x1xf32>
    %cst_23 = arith.constant 1.000000e+00 : f32
    %64 = vector.broadcast %cst_23 : f32 to vector<8x1xf32>
    %65 = arith.divf %64, %63 : vector<8x1xf32>
    %66 = arith.addf %58, %53 : vector<8x1xf32>
    %67 = arith.mulf %66, %65 : vector<8x1xf32>
    %68 = arith.addf %58, %27 : vector<8x1xf32>
    %69 = arith.mulf %68, %65 : vector<8x1xf32>
    %cst_24 = arith.constant 0.000000e+00 : f32
    %70 = vector.broadcast %cst_24 : f32 to vector<8x1xf32>
    %71 = arith.subf %70, %39 : vector<8x1xf32>
    %72 = arith.mulf %71, %65 : vector<8x1xf32>
    %c0_25 = arith.constant 0 : index
    %c0_26 = arith.constant 0 : index
    %73 = vector.load %arg2[%c0_25, %c0_26] : memref<8x8xf32, #tpu.memory_space<vmem>>, vector<8x8xf32>
    %74 = vector.extract_strided_slice %73 {offsets = [0, 0], sizes = [8, 1], strides = [1, 1]} : vector<8x8xf32> to vector<8x1xf32>
    %75 = vector.extract_strided_slice %73 {offsets = [0, 1], sizes = [8, 1], strides = [1, 1]} : vector<8x8xf32> to vector<8x1xf32>
    %76 = vector.extract_strided_slice %73 {offsets = [0, 2], sizes = [8, 1], strides = [1, 1]} : vector<8x8xf32> to vector<8x1xf32>
    %77 = vector.extract_strided_slice %73 {offsets = [0, 3], sizes = [8, 1], strides = [1, 1]} : vector<8x8xf32> to vector<8x1xf32>
    %78 = vector.extract_strided_slice %73 {offsets = [0, 4], sizes = [8, 1], strides = [1, 1]} : vector<8x8xf32> to vector<8x1xf32>
    %79 = arith.mulf %74, %67 : vector<8x1xf32>
    %80 = arith.mulf %75, %72 : vector<8x1xf32>
    %81 = arith.addf %79, %80 : vector<8x1xf32>
    %82 = arith.mulf %74, %72 : vector<8x1xf32>
    %83 = arith.mulf %75, %69 : vector<8x1xf32>
    %84 = arith.addf %82, %83 : vector<8x1xf32>
    %85 = arith.mulf %75, %67 : vector<8x1xf32>
    %86 = arith.mulf %76, %72 : vector<8x1xf32>
    %87 = arith.addf %85, %86 : vector<8x1xf32>
    %88 = arith.mulf %75, %72 : vector<8x1xf32>
    %89 = arith.mulf %76, %69 : vector<8x1xf32>
    %90 = arith.addf %88, %89 : vector<8x1xf32>
    %91 = arith.mulf %81, %8 : vector<8x1xf32>
    %92 = arith.mulf %84, %13 : vector<8x1xf32>
    %93 = arith.addf %91, %92 : vector<8x1xf32>
    %94 = arith.subf %77, %93 : vector<8x1xf32>
    %95 = arith.mulf %87, %8 : vector<8x1xf32>
    %96 = arith.mulf %90, %13 : vector<8x1xf32>
    %97 = arith.addf %95, %96 : vector<8x1xf32>
    %98 = arith.subf %78, %97 : vector<8x1xf32>
    %99 = vector.shape_cast %81 : vector<8x1xf32> to vector<1x8x1xf32>
    %100 = vector.broadcast %99 : vector<1x8x1xf32> to vector<2x8x256xf32>
    %101 = arith.mulf %100, %1 : vector<2x8x256xf32>
    %102 = vector.shape_cast %84 : vector<8x1xf32> to vector<1x8x1xf32>
    %103 = vector.broadcast %102 : vector<1x8x1xf32> to vector<2x8x256xf32>
    %104 = arith.mulf %103, %3 : vector<2x8x256xf32>
    %105 = arith.addf %101, %104 : vector<2x8x256xf32>
    %106 = vector.shape_cast %94 : vector<8x1xf32> to vector<1x8x1xf32>
    %107 = vector.broadcast %106 : vector<1x8x1xf32> to vector<2x8x256xf32>
    %108 = arith.addf %105, %107 : vector<2x8x256xf32>
    %c0_27 = arith.constant 0 : index
    %c0_28 = arith.constant 0 : index
    %c0_29 = arith.constant 0 : index
    %c0_30 = arith.constant 0 : index
    %109 = vector.load %arg3[%c0_27, %c0_28, %c0_29, %c0_30] : memref<2x2x8x256xf32, #tpu.memory_space<vmem>>, vector<2x1x8x256xf32>
    %110 = vector.shape_cast %109 : vector<2x1x8x256xf32> to vector<2x8x256xf32>
    %111 = vector.shape_cast %108 : vector<2x8x256xf32> to vector<2x1x8x256xf32>
    tpu.vector_store %arg3[%c0_27, %c0_28, %c0_29, %c0_30], %111 {strides = array<i32>} : memref<2x2x8x256xf32, #tpu.memory_space<vmem>>, vector<2x1x8x256xf32>,
    %112 = vector.shape_cast %87 : vector<8x1xf32> to vector<1x8x1xf32>
    %113 = vector.broadcast %112 : vector<1x8x1xf32> to vector<2x8x256xf32>
    %114 = arith.mulf %113, %1 : vector<2x8x256xf32>
    %115 = vector.shape_cast %90 : vector<8x1xf32> to vector<1x8x1xf32>
    %116 = vector.broadcast %115 : vector<1x8x1xf32> to vector<2x8x256xf32>
    %117 = arith.mulf %116, %3 : vector<2x8x256xf32>
    %118 = arith.addf %114, %117 : vector<2x8x256xf32>
    %119 = vector.shape_cast %98 : vector<8x1xf32> to vector<1x8x1xf32>
    %120 = vector.broadcast %119 : vector<1x8x1xf32> to vector<2x8x256xf32>
    %121 = arith.addf %118, %120 : vector<2x8x256xf32>
    %c0_31 = arith.constant 0 : index
    %c1_32 = arith.constant 1 : index
    %c0_33 = arith.constant 0 : index
    %c0_34 = arith.constant 0 : index
    %122 = vector.load %arg3[%c0_31, %c1_32, %c0_33, %c0_34] : memref<2x2x8x256xf32, #tpu.memory_space<vmem>>, vector<2x1x8x256xf32>
    %123 = vector.shape_cast %122 : vector<2x1x8x256xf32> to vector<2x8x256xf32>
    %124 = vector.shape_cast %121 : vector<2x8x256xf32> to vector<2x1x8x256xf32>
    tpu.vector_store %arg3[%c0_31, %c1_32, %c0_33, %c0_34], %124 {strides = array<i32>} : memref<2x2x8x256xf32, #tpu.memory_space<vmem>>, vector<2x1x8x256xf32>,
    return
  }
  func.func @transform_0(%arg0: i32) -> (i32, i32, i32, i32) {
    %c0_i32 = arith.constant 0 : i32
    %c0_i32_0 = arith.constant 0 : i32
    %c0_i32_1 = arith.constant 0 : i32
    %c0_i32_2 = arith.constant 0 : i32
    return %c0_i32, %c0_i32_0, %arg0, %c0_i32_1 : i32, i32, i32, i32
  }
  func.func @transform_1(%arg0: i32) -> (i32, i32) {
    %c0_i32 = arith.constant 0 : i32
    %c0_i32_0 = arith.constant 0 : i32
    return %arg0, %c0_i32 : i32, i32
  }
  func.func @transform_2(%arg0: i32) -> (i32, i32, i32, i32) {
    %c0_i32 = arith.constant 0 : i32
    %c0_i32_0 = arith.constant 0 : i32
    %c0_i32_1 = arith.constant 0 : i32
    %c0_i32_2 = arith.constant 0 : i32
    return %c0_i32, %c0_i32_0, %arg0, %c0_i32_1 : i32, i32, i32, i32
  }
}

</mosaic_0001>

<llo_original>
// kernel: complex_batch_norm.1
$region0: #{complex_batch_norm.1}
  #allocation0 [shape = 'u32[]', space=smem, size = 0x4, offset = 0x4, fixed_abs, tag = 'smem constant byte address 0x4 - core index']
  #allocation1 [shape = 'u32[144,128]{1,0:T(1,128)}', space=vmem, size = 0x12000, scoped, tag = 'internal scratch']
  %s0 = inlined_call_operand.vmem [shape: f32[2,2,16,256], index: 0, kind: input, shape index: {}]
  %s1 = inlined_call_operand.vmem [shape: f32[16,8], index: 1, kind: input, shape index: {}]
  %s2 = inlined_call_operand.vmem [shape: f32[2,2,16,256], index: 2, kind: output, shape index: {}]
  %s3 = sld [smem:[#allocation0]]
  $region83: #{complex_batch_norm.1} parent=0
    _
  %s5 = ssub.s32 1, %s3
  %s6 = scalar_select 0, %s5, %s3
  $region1: #{complex_batch_norm.1} parent=0
    #allocation2 [shape = 'u8[65536]{0}', space=vmem, size = 0x10000, scoped, tag = 'input window, operand 0']
    #allocation3 [shape = 'u8[65536]{0}', space=vmem, size = 0x10000, scoped, tag = 'output window, operand 0']
    loop: start=0, step=1, limit=4
    $region2: #{complex_batch_norm.1} parent=1 // loop_pre_header
      _
    $region3: #{complex_batch_norm.1} parent=1 // loop_header
      %s8 = sphi 0, %s12
      %p9 = scmp.ge.s32.totalorder %s8, 4
      %s18 = sphi 0, %s20
      %s21 = sphi 0, %s18
      %s22 = sphi 0, %s21
      %s38 = sphi 0, %s22
      %s44 = sphi 0, %s46
      %s47 = sphi 0, %s44
      %s48 = sphi 0, %s47
      %s64 = sphi 0, %s48
      %s70 = sphi 0, %s72
      %s73 = sphi 0, %s70
      %s74 = sphi 0, %s73
      %s90 = sphi 0, %s74
    $region4: #{complex_batch_norm.1} parent=1 // loop_header_branch
      %11 = sbr.rel (%p9) target = $region8
    $region5: #{complex_batch_norm.1} parent=1 // loop_body
      %s13 = ssub.s32 %s8, 1
      %s14 = ssub.s32 %s8, 2
      %s15 = sadd.s32 %s8, 1
      %s16 = ssub.s32 %s8, %s15
      %p17 = scmp.eq.s32.totalorder %s16, 0
      %s19 = sadd.s32 %s18, 1
      %s20 = scalar_select %p17, %s18, %s19
      %p23 = pneg %p17
      %p24 = scmp.eq.s32.totalorder %s8, 1
      %p25 = por %p23, %p24
      %p26 = scmp.ne.s32.totalorder %s18, %s21
      %p27 = scmp.eq.s32.totalorder %s8, 0
      %p28 = por %p26, %p27
      %p29 = scmp.ne.s32.totalorder %s18, %s21
      %p30 = scmp.eq.s32.totalorder %s13, 1
      %p31 = por %p29, %p30
      %p32 = scmp.ne.s32.totalorder %s21, %s22
      %p33 = scmp.eq.s32.totalorder %s13, 0
      %p34 = por %p32, %p33
      %p35 = scmp.ne.s32.totalorder %s21, %s22
      %p36 = scmp.eq.s32.totalorder %s14, 1
      %p37 = por %p35, %p36
      %p39 = scmp.ne.s32.totalorder %s22, %s38
      %p40 = scmp.eq.s32.totalorder %s14, 0
      %p41 = por %p39, %p40
      %s42 = ssub.s32 %s8, %s15
      %p43 = scmp.eq.s32.totalorder %s42, 0
      %s45 = sadd.s32 %s44, 1
      %s46 = scalar_select %p43, %s44, %s45
      %p49 = pneg %p43
      %p50 = scmp.eq.s32.totalorder %s8, 1
      %p51 = por %p49, %p50
      %p52 = scmp.ne.s32.totalorder %s44, %s47
      %p53 = scmp.eq.s32.totalorder %s8, 0
      %p54 = por %p52, %p53
      %p55 = scmp.ne.s32.totalorder %s44, %s47
      %p56 = scmp.eq.s32.totalorder %s13, 1
      %p57 = por %p55, %p56
      %p58 = scmp.ne.s32.totalorder %s47, %s48
      %p59 = scmp.eq.s32.totalorder %s13, 0
      %p60 = por %p58, %p59
      %p61 = scmp.ne.s32.totalorder %s47, %s48
      %p62 = scmp.eq.s32.totalorder %s14, 1
      %p63 = por %p61, %p62
      %p65 = scmp.ne.s32.totalorder %s48, %s64
      %p66 = scmp.eq.s32.totalorder %s14, 0
      %p67 = por %p65, %p66
      %s68 = ssub.s32 %s8, %s15
      %p69 = scmp.eq.s32.totalorder %s68, 0
      %s71 = sadd.s32 %s70, 1
      %s72 = scalar_select %p69, %s70, %s71
      %p75 = pneg %p69
      %p76 = scmp.eq.s32.totalorder %s8, 1
      %p77 = por %p75, %p76
      %p78 = scmp.ne.s32.totalorder %s70, %s73
      %p79 = scmp.eq.s32.totalorder %s8, 0
      %p80 = por %p78, %p79
      %p81 = scmp.ne.s32.totalorder %s70, %s73
      %p82 = scmp.eq.s32.totalorder %s13, 1
      %p83 = por %p81, %p82
      %p84 = scmp.ne.s32.totalorder %s73, %s74
      %p85 = scmp.eq.s32.totalorder %s13, 0
      %p86 = por %p84, %p85
      %p87 = scmp.ne.s32.totalorder %s73, %s74
      %p88 = scmp.eq.s32.totalorder %s14, 1
      %p89 = por %p87, %p88
      %p91 = scmp.ne.s32.totalorder %s74, %s90
      %p92 = scmp.eq.s32.totalorder %s14, 0
      %p93 = por %p91, %p92
      %p94 = scmp.le.s32.totalorder 1, %s8
      %p95 = scmp.lt.s32.totalorder %s8, 3
      %p96 = pnand %p94, %p95
      %p97 = pneg %p96
      // Predicated region
      $region9: #{complex_batch_norm.1} parent=5 // pred_check
        _
      $region10: #{complex_batch_norm.1} parent=5 // pred_check_branch
        %99 = sbr.rel (%p96) target = $region12
      $region11: #{complex_batch_norm.1} parent=5 // pred_region
        %s100 = ssub.s32 %s8, 1
      $region12: #{complex_batch_norm.1} parent=5 // pred_fallthru
        _
      %p101 = scmp.lt.s32.totalorder %s8, 2
      // Predicated region
      $region13: #{complex_batch_norm.1} parent=5 // pred_check
        %p102 = pneg %p101
      $region14: #{complex_batch_norm.1} parent=5 // pred_check_branch
        %104 = sbr.rel (%p102) target = $region16
      $region15: #{complex_batch_norm.1} parent=5 // pred_region
        // Predicated region
        $region17: #{complex_batch_norm.1} parent=15 // pred_check
          %p105 = pneg %p28
        $region18: #{complex_batch_norm.1} parent=15 // pred_check_branch
          %107 = sbr.rel (%p105) target = $region20
        $region19: #{complex_batch_norm.1} parent=15 // pred_region
          %s108 = sand.u32 %s18, 1
          %s109 = sand.u32 %s18, 1
          %s110 = smul.addr %s109, 64
          %s111 = scalar_lea.vmem [#allocation2], %s110
          %s112 = smul.addr %s8, 2
          %s113 = smul.addr %s112, 8
          %s114 = scalar_lea.vmem %s0, %s113
          // Predicated region
          $region21: #{complex_batch_norm.1} parent=19 // pred_check
            _
          $region22: #{complex_batch_norm.1} parent=19 // pred_check_branch
            %116 = sbr.rel (0) target = $region24
          $region23: #{complex_batch_norm.1} parent=19 // pred_region
            // Predicated region
            $region25: #{complex_batch_norm.1} parent=23 // pred_check
              _
            $region26: #{complex_batch_norm.1} parent=23 // pred_check_branch
              %118 = sbr.rel (0) target = $region28
            $region27: #{complex_batch_norm.1} parent=23 // pred_region
              loop: start=0, step=1, limit=1
              $region29: #{complex_batch_norm.1} parent=27 // loop_pre_header
                _
              $region30: #{complex_batch_norm.1} parent=27 // loop_header
                %s120 = sphi 0, %s124
                %p121 = scmp.ge.s32.totalorder %s120, 1
                %s125 = sphi %s114, %s114
                %s126 = sphi %s111, %s111
              $region31: #{complex_batch_norm.1} parent=27 // loop_header_branch
                %123 = sbr.rel (%p121) target = $region35
              $region32: #{complex_batch_norm.1} parent=27 // loop_body
                %v127 = vld [vmem:[%s125] sm:$0xff]
                %128 = vst [vmem:[%s126] sm:$0xff] %v127
                %v129 = vld [vmem:[%s125 + $0x8] sm:$0xff]
                %130 = vst [vmem:[%s126 + $0x8] sm:$0xff] %v129
                %v131 = vld [vmem:[%s125 + $0x20] sm:$0xff]
                %132 = vst [vmem:[%s126 + $0x10] sm:$0xff] %v131
                %v133 = vld [vmem:[%s125 + $0x28] sm:$0xff]
                %134 = vst [vmem:[%s126 + $0x18] sm:$0xff] %v133
                %v135 = vld [vmem:[%s125 + $0x40] sm:$0xff]
                %136 = vst [vmem:[%s126 + $0x20] sm:$0xff] %v135
                %v137 = vld [vmem:[%s125 + $0x48] sm:$0xff]
                %138 = vst [vmem:[%s126 + $0x28] sm:$0xff] %v137
                %v139 = vld [vmem:[%s125 + $0x60] sm:$0xff]
                %140 = vst [vmem:[%s126 + $0x30] sm:$0xff] %v139
                %v141 = vld [vmem:[%s125 + $0x68] sm:$0xff]
                %142 = vst [vmem:[%s126 + $0x38] sm:$0xff] %v141
              $region33: #{complex_batch_norm.1} parent=27 // loop_footer
                %s124 = sadd.s32 1, %s120
              $region34: #{complex_batch_norm.1} parent=27 // loop_footer_branch
                %119 = sbr.rel target = $region30
              $region35: #{complex_batch_norm.1} parent=27 // loop_exit
                _
            $region28: #{complex_batch_norm.1} parent=23 // pred_fallthru
              _
            // Predicated region
            $region36: #{complex_batch_norm.1} parent=23 // pred_check
              _
            $region37: #{complex_batch_norm.1} parent=23 // pred_check_branch
              %144 = sbr.rel target = $region39
            $region38: #{complex_batch_norm.1} parent=23 // pred_region
              _
            $region39: #{complex_batch_norm.1} parent=23 // pred_fallthru
              _
          $region24: #{complex_batch_norm.1} parent=19 // pred_fallthru
            _
          %145 = vnop
        $region20: #{complex_batch_norm.1} parent=15 // pred_fallthru
          _
        // Predicated region
        $region40: #{complex_batch_norm.1} parent=15 // pred_check
          %p146 = pneg %p54
        $region41: #{complex_batch_norm.1} parent=15 // pred_check_branch
          %148 = sbr.rel (%p146) target = $region43
        $region42: #{complex_batch_norm.1} parent=15 // pred_region
          %p149 = scmp.lt.s32.totalorder %s8, 1
          %s150 = scalar_select %p149, %s8, 1
          %s151 = smul.addr %s150, 8
          %s152 = scalar_lea.vmem %s1, %s151
        $region43: #{complex_batch_norm.1} parent=15 // pred_fallthru
          _
      $region16: #{complex_batch_norm.1} parent=5 // pred_fallthru
        _
      %p153 = scmp.le.s32.totalorder 1, %s8
      %p154 = scmp.lt.s32.totalorder %s8, 3
      %p155 = pnand %p153, %p154
      %p156 = pneg %p155
      // Predicated region
      $region44: #{complex_batch_norm.1} parent=5 // pred_check
        _
      $region45: #{complex_batch_norm.1} parent=5 // pred_check_branch
        %158 = sbr.rel (%p155) target = $region47
      $region46: #{complex_batch_norm.1} parent=5 // pred_region
        %s159 = ssub.s32 %s8, 1
        %s160 = sand.u32 %s21, 1
        %s161 = sand.u32 %s21, 1
        %s162 = smul.addr %s161, 64
        %s163 = scalar_lea.vmem [#allocation2], %s162
        // Predicated region
        $region48: #{complex_batch_norm.1} parent=46 // pred_check
          %p164 = pneg %p34
        $region49: #{complex_batch_norm.1} parent=46 // pred_check_branch
          %166 = sbr.rel (%p164) target = $region51
        $region50: #{complex_batch_norm.1} parent=46 // pred_region
          _
        $region51: #{complex_batch_norm.1} parent=46 // pred_fallthru
          _
        %s167 = sand.u32 %s21, 1
        %s168 = sand.u32 %s21, 1
        %s169 = smul.addr %s168, 64
        %s170 = scalar_lea.vmem [#allocation2], %s169
        %p171 = pneg %p34
        %p172 = pneg %p31
        %p173 = scmp.lt.s32.totalorder %s13, 1
        %s174 = scalar_select %p173, %s13, 1
        %s175 = smul.addr %s174, 8
        %s176 = scalar_lea.vmem %s1, %s175
        %p177 = pneg %p60
        %p178 = pneg %p57
        %p179 = pneg %p86
        %p180 = pneg %p83
        %s181 = sand.u32 %s73, 1
        %s182 = sand.u32 %s73, 1
        %s183 = smul.addr %s182, 64
        %s184 = scalar_lea.vmem [#allocation3], %s183
        %p185 = scmp.lt.s32.totalorder %s13, 1
        %s186 = scalar_select %p185, %s13, 1
        %s187 = smul.addr %s186, 8
        %s188 = scalar_lea.vmem %s1, %s187
        %v189 = vld [vmem:[%s163] sm:$0xff]
        %v190 = vld [vmem:[%s163 + $0x8] sm:$0xff]
        %v191 = vld [vmem:[%s163 + $0x20] sm:$0xff]
        %v192 = vld [vmem:[%s163 + $0x28] sm:$0xff]
        %s193 = scalar_lea.vmem %s163, 16 [#allocation2]
        %v194 = vld [vmem:[%s193] sm:$0xff]
        %v195 = vld [vmem:[%s193 + $0x8] sm:$0xff]
        %v196 = vld [vmem:[%s193 + $0x20] sm:$0xff]
        %v197 = vld [vmem:[%s193 + $0x28] sm:$0xff]
        %v198 = vadd.f32 %v189, %v191
        %v199 = vadd.f32 %v190, %v192
        %v200 = vadd.f32 %v198, %v199
        %201 = vadd.xlane.f32.xlu0 %v200
        %v202 = vpop.xlane.xlu0 %201
        %v203 = vmul.f32 %v202, 0.001953125
        %v204 = vadd.f32 %v194, %v196
        %v205 = vadd.f32 %v195, %v197
        %v206 = vadd.f32 %v204, %v205
        %207 = vadd.xlane.f32.xlu0 %v206
        %v208 = vpop.xlane.xlu0 %207
        %v209 = vmul.f32 %v208, 0.001953125
        %v210 = vsub.f32 %v189, %v203
        %v211 = vsub.f32 %v190, %v203
        %v212 = vsub.f32 %v191, %v203
        %v213 = vsub.f32 %v192, %v203
        %v214 = vmul.f32 %v210, %v210
        %v215 = vmul.f32 %v211, %v211
        %v216 = vmul.f32 %v212, %v212
        %v217 = vmul.f32 %v213, %v213
        %v218 = vadd.f32 %v214, %v216
        %v219 = vadd.f32 %v215, %v217
        %v220 = vadd.f32 %v218, %v219
        %221 = vadd.xlane.f32.xlu0 %v220
        %v222 = vpop.xlane.xlu0 %221
        %v223 = vmul.f32 %v222, 0.001953125
        %v224 = vadd.f32 %v223, 1e-05
        %v225 = vsub.f32 %v194, %v209
        %v226 = vsub.f32 %v195, %v209
        %v227 = vsub.f32 %v196, %v209
        %v228 = vsub.f32 %v197, %v209
        %v229 = vmul.f32 %v210, %v225
        %v230 = vmul.f32 %v211, %v226
        %v231 = vmul.f32 %v212, %v227
        %v232 = vmul.f32 %v213, %v228
        %v233 = vadd.f32 %v229, %v231
        %v234 = vadd.f32 %v230, %v232
        %v235 = vadd.f32 %v233, %v234
        %236 = vadd.xlane.f32.xlu0 %v235
        %v237 = vpop.xlane.xlu0 %236
        %v238 = vmul.f32 %v237, 0.001953125
        %v239 = vmul.f32 %v225, %v225
        %v240 = vmul.f32 %v226, %v226
        %v241 = vmul.f32 %v227, %v227
        %v242 = vmul.f32 %v228, %v228
        %v243 = vadd.f32 %v239, %v241
        %v244 = vadd.f32 %v240, %v242
        %v245 = vadd.f32 %v243, %v244
        %246 = vadd.xlane.f32.xlu0 %v245
        %v247 = vpop.xlane.xlu0 %246
        %v248 = vmul.f32 %v247, 0.001953125
        %v249 = vadd.f32 %v248, 1e-05
        %v250 = vadd.f32 %v224, %v249
        %v251 = vmul.f32 %v224, %v249
        %v252 = vmul.f32 %v238, %v238
        %v253 = vsub.f32 %v251, %v252
        %v254 = vrsqrt.pop %v253
        %v255 = vmul.f32 %v253, %v254
        %vm256 = vcmp.eq.f32.partialorder %v253, inf
        %v257 = vsel %vm256, %v253, %v255
        %vm258 = vcmp.eq.f32.partialorder %v253, 0.0
        %v259 = vand.u32 %v253, 2147483648
        %v260 = vsel %vm258, %v259, %v257
        %v261 = vmul.f32 %v260, 2.0
        %v262 = vadd.f32 %v250, %v261
        %v263 = vrsqrt.pop %v262
        %v264 = vmul.f32 %v262, %v263
        %vm265 = vcmp.eq.f32.partialorder %v262, inf
        %v266 = vsel %vm265, %v262, %v264
        %vm267 = vcmp.eq.f32.partialorder %v262, 0.0
        %v268 = vand.u32 %v262, 2147483648
        %v269 = vsel %vm267, %v268, %v266
        %v270 = vmul.f32 %v260, %v269
        %v271 = vrcp.pop %v270
        %v272 = vmul.f32 1.0, %v271
        %v273 = vadd.f32 %v260, %v249
        %v274 = vmul.f32 %v273, %v272
        %v275 = vadd.f32 %v260, %v224
        %v276 = vmul.f32 %v275, %v272
        %v277 = vsub.f32 0.0, %v238
        %v278 = vmul.f32 %v277, %v272
        %v279 = vld [vmem:[%s188] sm:$0xff]
        %v280 = vmul.f32 %v279, %v274
        %v281 = vmul.f32 %v279, %v278
        %283 = vrot.lane.b32.xlu0 %v281, 127
        %v284 = vpop.permute.xlu0 %283
        %v286 = vadd.f32 %v280, %v284
        %v287 = vmul.f32 %v279, %v276
        %289 = vrot.lane.b32.xlu0 %v287, 127
        %v290 = vpop.permute.xlu0 %289
        %v292 = vadd.f32 %v281, %v290
        %v293 = vmul.f32 %v286, %v203
        %v294 = vmul.f32 %v292, %v209
        %v295 = vadd.f32 %v293, %v294
        %297 = vrot.lane.b32.xlu0 %v295, 3
        %v298 = vpop.permute.xlu0 %297
        %v300 = vsub.f32 %v279, %v298
        %302 = vset.pattern.permute.xlu0 0
        %303 = vperm.xlu0 %302, %v286
        %v304 = vpop.permute.xlu0 %303
        %v306 = vmul.f32 %v304, %v189
        %v307 = vmul.f32 %v304, %v190
        %v308 = vmul.f32 %v304, %v191
        %v309 = vmul.f32 %v304, %v192
        %311 = vset.pattern.permute.xlu0 0
        %312 = vperm.xlu0 %311, %v292
        %v313 = vpop.permute.xlu0 %312
        %v315 = vmul.f32 %v313, %v194
        %v316 = vmul.f32 %v313, %v195
        %v317 = vmul.f32 %v313, %v196
        %v318 = vmul.f32 %v313, %v197
        %v319 = vadd.f32 %v306, %v315
        %v320 = vadd.f32 %v307, %v316
        %v321 = vadd.f32 %v308, %v317
        %v322 = vadd.f32 %v309, %v318
        %324 = vset.pattern.permute.xlu0 3
        %325 = vperm.xlu0 %324, %v300
        %v326 = vpop.permute.xlu0 %325
        %v328 = vadd.f32 %v319, %v326
        %v329 = vadd.f32 %v320, %v326
        %v330 = vadd.f32 %v321, %v326
        %v331 = vadd.f32 %v322, %v326
        %332 = vst [vmem:[%s184] sm:$0xff] %v328
        %333 = vst [vmem:[%s184 + $0x8] sm:$0xff] %v329
        %334 = vst [vmem:[%s184 + $0x20] sm:$0xff] %v330
        %335 = vst [vmem:[%s184 + $0x28] sm:$0xff] %v331
        %336 = vset.pattern.permute.xlu0 1
        %337 = vperm.xlu0 %336, %v286
        %v338 = vpop.permute.xlu0 %337
        %v340 = vmul.f32 %v338, %v189
        %v341 = vmul.f32 %v338, %v190
        %v342 = vmul.f32 %v338, %v191
        %v343 = vmul.f32 %v338, %v192
        %344 = vset.pattern.permute.xlu0 1
        %345 = vperm.xlu0 %344, %v292
        %v346 = vpop.permute.xlu0 %345
        %v348 = vmul.f32 %v346, %v194
        %v349 = vmul.f32 %v346, %v195
        %v350 = vmul.f32 %v346, %v196
        %v351 = vmul.f32 %v346, %v197
        %v352 = vadd.f32 %v340, %v348
        %v353 = vadd.f32 %v341, %v349
        %v354 = vadd.f32 %v342, %v350
        %v355 = vadd.f32 %v343, %v351
        %356 = vset.pattern.permute.xlu0 4
        %357 = vperm.xlu0 %356, %v300
        %v358 = vpop.permute.xlu0 %357
        %v360 = vadd.f32 %v352, %v358
        %v361 = vadd.f32 %v353, %v358
        %v362 = vadd.f32 %v354, %v358
        %v363 = vadd.f32 %v355, %v358
        %s364 = scalar_lea.vmem %s184, 16 [#allocation3]
        %365 = vst [vmem:[%s364] sm:$0xff] %v360
        %366 = vst [vmem:[%s364 + $0x8] sm:$0xff] %v361
        %367 = vst [vmem:[%s364 + $0x20] sm:$0xff] %v362
        %368 = vst [vmem:[%s364 + $0x28] sm:$0xff] %v363
        %s369 = sand.u32 %s73, 1
        %s370 = sand.u32 %s73, 1
        %s371 = smul.addr %s370, 64
        %s372 = scalar_lea.vmem [#allocation3], %s371
        // Predicated region
        $region52: #{complex_batch_norm.1} parent=46 // pred_check
          %p373 = pneg %p83
        $region53: #{complex_batch_norm.1} parent=46 // pred_check_branch
          %375 = sbr.rel (%p373) target = $region55
        $region54: #{complex_batch_norm.1} parent=46 // pred_region
          %s376 = smul.addr %s13, 2
          %s377 = smul.addr %s376, 8
          %s378 = scalar_lea.vmem %s2, %s377
          // Predicated region
          $region56: #{complex_batch_norm.1} parent=54 // pred_check
            _
          $region57: #{complex_batch_norm.1} parent=54 // pred_check_branch
            %380 = sbr.rel (0) target = $region59
          $region58: #{complex_batch_norm.1} parent=54 // pred_region
            // Predicated region
            $region60: #{complex_batch_norm.1} parent=58 // pred_check
              _
            $region61: #{complex_batch_norm.1} parent=58 // pred_check_branch
              %382 = sbr.rel (0) target = $region63
            $region62: #{complex_batch_norm.1} parent=58 // pred_region
              loop: start=0, step=1, limit=1
              $region64: #{complex_batch_norm.1} parent=62 // loop_pre_header
                _
              $region65: #{complex_batch_norm.1} parent=62 // loop_header
                %s384 = sphi 0, %s388
                %p385 = scmp.ge.s32.totalorder %s384, 1
                %s389 = sphi %s372, %s372
                %s390 = sphi %s378, %s378
              $region66: #{complex_batch_norm.1} parent=62 // loop_header_branch
                %387 = sbr.rel (%p385) target = $region70
              $region67: #{complex_batch_norm.1} parent=62 // loop_body
                %v391 = vld [vmem:[%s389] sm:$0xff]
                %392 = vst [vmem:[%s390] sm:$0xff] %v391
                %v393 = vld [vmem:[%s389 + $0x8] sm:$0xff]
                %394 = vst [vmem:[%s390 + $0x8] sm:$0xff] %v393
                %v395 = vld [vmem:[%s389 + $0x10] sm:$0xff]
                %396 = vst [vmem:[%s390 + $0x20] sm:$0xff] %v395
                %v397 = vld [vmem:[%s389 + $0x18] sm:$0xff]
                %398 = vst [vmem:[%s390 + $0x28] sm:$0xff] %v397
                %v399 = vld [vmem:[%s389 + $0x20] sm:$0xff]
                %400 = vst [vmem:[%s390 + $0x40] sm:$0xff] %v399
                %v401 = vld [vmem:[%s389 + $0x28] sm:$0xff]
                %402 = vst [vmem:[%s390 + $0x48] sm:$0xff] %v401
                %v403 = vld [vmem:[%s389 + $0x30] sm:$0xff]
                %404 = vst [vmem:[%s390 + $0x60] sm:$0xff] %v403
                %v405 = vld [vmem:[%s389 + $0x38] sm:$0xff]
                %406 = vst [vmem:[%s390 + $0x68] sm:$0xff] %v405
              $region68: #{complex_batch_norm.1} parent=62 // loop_footer
                %s388 = sadd.s32 1, %s384
              $region69: #{complex_batch_norm.1} parent=62 // loop_footer_branch
                %383 = sbr.rel target = $region65
              $region70: #{complex_batch_norm.1} parent=62 // loop_exit
                _
            $region63: #{complex_batch_norm.1} parent=58 // pred_fallthru
              _
            // Predicated region
            $region71: #{complex_batch_norm.1} parent=58 // pred_check
              _
            $region72: #{complex_batch_norm.1} parent=58 // pred_check_branch
              %408 = sbr.rel target = $region74
            $region73: #{complex_batch_norm.1} parent=58 // pred_region
              _
            $region74: #{complex_batch_norm.1} parent=58 // pred_fallthru
              _
          $region59: #{complex_batch_norm.1} parent=54 // pred_fallthru
            _
          %409 = vnop
        $region55: #{complex_batch_norm.1} parent=46 // pred_fallthru
          _
      $region47: #{complex_batch_norm.1} parent=5 // pred_fallthru
        _
      %p410 = scmp.le.s32.totalorder 2, %s8
      // Predicated region
      $region75: #{complex_batch_norm.1} parent=5 // pred_check
        %p411 = pneg %p410
      $region76: #{complex_batch_norm.1} parent=5 // pred_check_branch
        %413 = sbr.rel (%p411) target = $region78
      $region77: #{complex_batch_norm.1} parent=5 // pred_region
        %s414 = ssub.s32 %s8, 2
        // Predicated region
        $region79: #{complex_batch_norm.1} parent=77 // pred_check
          %p415 = pneg %p89
        $region80: #{complex_batch_norm.1} parent=77 // pred_check_branch
          %417 = sbr.rel (%p415) target = $region82
        $region81: #{complex_batch_norm.1} parent=77 // pred_region
          %s418 = sand.u32 %s74, 1
          %s419 = sand.u32 %s74, 1
          %s420 = smul.addr %s419, 64
          %s421 = scalar_lea.vmem [#allocation3], %s420
        $region82: #{complex_batch_norm.1} parent=77 // pred_fallthru
          _
      $region78: #{complex_batch_norm.1} parent=5 // pred_fallthru
        _
    $region6: #{complex_batch_norm.1} parent=1 // loop_footer
      %s12 = sadd.s32 1, %s8
    $region7: #{complex_batch_norm.1} parent=1 // loop_footer_branch
      %7 = sbr.rel target = $region3
    $region8: #{complex_batch_norm.1} parent=1 // loop_exit
      _

</llo_original>
